<compile_context>
chip_gen: v7x
topology: tpu7x:2x2x1
jax: 0.10.0
libtpu: 0.0.40
codegen_flags: <defaults>
</compile_context>

<pallas_src>
import functools

import numpy as np
import jax
import jax.numpy as jnp
from jax.experimental import pallas as pl
from jax.experimental.pallas import tpu as pltpu


def _istft_ola_kernel(xf_ref, basis_ref, env_ref, out_ref, *, T, hop, R):
    """Synthesis matmul + overlap-add + inverse-envelope for ONE batch element.

    xf_ref:    (T, 2F)       interleaved [re, im] spectrogram coefficients (f32)
    basis_ref: (2F, n_fft)   shared iRFFT * window synthesis basis (compute dtype)
    env_ref:   (M_pad, hop)  1 / OLA(window^2) envelope, zero in padding rows (f32)
    out_ref:   (M_pad, hop)  time signal, chunked into hop-sample rows (f32)
    """
    # Single MXU matmul: each row is one windowed-iRFFT frame; f32 accumulation.
    frames = jnp.dot(xf_ref[...].astype(basis_ref.dtype), basis_ref[...],
                     preferred_element_type=jnp.float32)            # (T, n_fft)

    # Overlap-add.  Frame t covers samples [t*hop, t*hop + n_fft); with
    # R = n_fft // hop its r-th hop-chunk lands in output chunk row t + r, so
    # the whole OLA is R static shifted accumulates (static sublane / static
    # lane offsets only -> robust lowering, no dynamic-lane stores).
    out_ref[...] = jnp.zeros_like(out_ref)
    for r in range(R):                                             # R is small & static
        out_ref[pl.ds(r, T), :] += frames[:, r * hop:(r + 1) * hop]

    # Inverse window-power envelope (padding rows are zeroed by env == 0),
    # applied in f32 after accumulation.
    out_ref[...] = out_ref[...] * env_ref[...]


def _build_istft_tables(n_fft, hop, win_length, T, length, dtype):
    """Host (numpy) precompute of the shared synthesis basis and inverse envelope.

    Returns:
      basis:   (2F, n_fft) `dtype`; row 2f = w_f*cos(2*pi*f*n/N)*window[n],
               row 2f+1 = -w_f*sin(2*pi*f*n/N)*window[n] (iRFFT with window
               folded in); imag rows of DC/Nyquist zeroed (irfft ignores them).
      inv_env: (M_pad, hop) f32; 1 / OLA(window^2) laid out as hop-sample chunk
               rows (row m, col r == flat sample m*hop + r), zero in pad rows.
    """
    # TODO(synk): upstream DCCRN `istft` exact settings unknown; periodic Hann,
    # center=True, onesided=True, normalized=False, win_length == n_fft assumed.
    assert win_length == n_fft, "setup assumes win_length == n_fft"
    # TODO(synk): general hop (n_fft % hop != 0) would need a gcd-sized chunk OLA.
    assert n_fft % hop == 0, "setup assumes hop_length divides n_fft"
    N = n_fft
    F = N // 2 + 1
    R = N // hop
    pad = N // 2
    M = T + R - 1                         # number of hop-sized output chunks
    L_full = hop * M                      # == N + hop*(T-1)
    assert L_full >= pad + length, "not enough frames for requested length"

    n = np.arange(N)
    window = 0.5 * (1.0 - np.cos(2.0 * np.pi * n / win_length))   # periodic Hann

    # One-sided inverse real-DFT basis, synthesis window folded in.
    w = np.full(F, 2.0 / N)
    w[0] = 1.0 / N
    if N % 2 == 0:
        w[F - 1] = 1.0 / N
    ang = 2.0 * np.pi * np.arange(F)[:, None] * n[None, :] / N
    basis_r = (w[:, None] * np.cos(ang)) * window[None, :]
    basis_i = (-w[:, None] * np.sin(ang)) * window[None, :]
    basis_i[0, :] = 0.0                   # irfft ignores imag of DC
    if N % 2 == 0:
        basis_i[F - 1, :] = 0.0           # ... and of Nyquist
    basis = np.zeros((2 * F, N), dtype=np.float64)
    basis[0::2] = basis_r                 # interleave to match (f, re/im) packing of x
    basis[1::2] = basis_i

    # Overlap-added window^2 envelope -> inverse, chunked as (M, hop).
    env = np.zeros(L_full)
    for t in range(T):
        env[t * hop:t * hop + N] += window ** 2
    inv_env = 1.0 / np.maximum(env, 1e-8)
    # NOTE: matches the numpy-reference clamp; torch.istft instead asserts a
    # strictly nonzero envelope.  For COLA Hann/hop configs the returned
    # [pad, pad+length) window is well away from the clamp.
    M_pad = -(-M // 8) * 8                # sublane-pad the chunk axis
    env2d = np.zeros((M_pad, hop), dtype=np.float32)
    env2d[:M] = inv_env.reshape(M, hop)

    return (jnp.asarray(basis.astype(np.float32), dtype=dtype),
            jnp.asarray(env2d))


@functools.partial(jax.jit, static_argnames=("length",))
def _istft_forward(x, basis, inv_env, *, length):
    B, C, F, T, D = x.shape
    K, N = basis.shape                    # K = 2F, N = n_fft
    M_pad, hop = inv_env.shape
    R = N // hop
    pad = N // 2

    # Prologue collapsed to a single transpose+reshape; re/im interleave along
    # the last axis matches the basis row order.  bf16 cast happens in-kernel.
    xf = jnp.swapaxes(x[:, 0], 1, 2).reshape(B, T, K)   # (B, T, 2F) f32

    kernel = functools.partial(_istft_ola_kernel, T=T, hop=hop, R=R)
    out = pl.pallas_call(
        kernel,
        out_shape=jax.ShapeDtypeStruct((B, M_pad, hop), jnp.float32),
        grid=(B,),
        in_specs=[
            pl.BlockSpec((None, T, K), lambda b: (b, 0, 0)),      # per-batch coeffs
            pl.BlockSpec((K, N), lambda b: (0, 0)),               # shared basis (resident)
            pl.BlockSpec((M_pad, hop), lambda b: (0, 0)),         # shared inverse envelope
        ],
        out_specs=pl.BlockSpec((None, M_pad, hop), lambda b: (b, 0, 0)),
        compiler_params=pltpu.CompilerParams(
            dimension_semantics=("parallel",)),                   # megacore: split batches
        cost_estimate=pl.CostEstimate(
            flops=2 * B * T * K * N,
            transcendentals=0,
            bytes_accessed=(B * T * K * x.dtype.itemsize
                            + K * N * basis.dtype.itemsize
                            + M_pad * hop * 4
                            + B * M_pad * hop * 4)),
    )(xf, basis, inv_env)

    # Chunk rows -> flat signal; trim the centered window [pad, pad + length).
    y = out.reshape(B, M_pad * hop)[:, pad:pad + length]
    return y.reshape(B, C, length)


class ISTFTPallas:
    """Pallas TPU re-implementation of DCCRN ISTFT (onesided, center=True, Hann)."""

    def __init__(self, n_fft, hop_length, win_length, length=600,
                 compute_dtype=jnp.bfloat16):
        self.n_fft = n_fft
        self.hop_length = hop_length
        self.win_length = win_length
        self.length = length              # hardcoded 600 in the PyTorch module
        self.compute_dtype = compute_dtype
        self._cache = {}                  # T -> (basis, inv_env)

    def _tables(self, T):
        if T not in self._cache:
            self._cache[T] = _build_istft_tables(
                self.n_fft, self.hop_length, self.win_length, T,
                self.length, self.compute_dtype)
        return self._cache[T]

    def __call__(self, x):
        B, C, F, T, D = x.shape
        assert C == 1 and D == 2 and F == self.n_fft // 2 + 1
        basis, inv_env = self._tables(T)
        return _istft_forward(x, basis, inv_env, length=self.length)


def _numpy_reference(x, n_fft, hop_length, win_length, length):
    x = np.asarray(x, dtype=np.float64)
    B, C, F, T, D = x.shape
    spec = x[:, 0, :, :, 0] + 1j * x[:, 0, :, :, 1]        # (B, F, T)
    spec[:, 0, :] = spec[:, 0, :].real                     # irfft ignores imag DC
    spec[:, -1, :] = spec[:, -1, :].real                   # and imag Nyquist
    n = np.arange(n_fft)
    window = 0.5 * (1.0 - np.cos(2.0 * np.pi * n / win_length))
    frames = np.fft.irfft(spec, n=n_fft, axis=1) * window[None, :, None]  # (B, N, T)
    L_full = n_fft + hop_length * (T - 1)
    y = np.zeros((B, L_full))
    env = np.zeros((L_full,))
    for t in range(T):
        y[:, t * hop_length:t * hop_length + n_fft] += frames[:, :, t]
        env[t * hop_length:t * hop_length + n_fft] += window ** 2
    y = y / np.maximum(env, 1e-8)[None, :]
    pad = n_fft // 2
    return y[:, pad:pad + length].reshape(B, C, length)


if __name__ == "__main__":
    key0, key1 = jax.random.split(jax.random.PRNGKey(0))

    # Config 1: matches the original small test (R = n_fft/hop = 2).
    n_fft, hop_length, win_length = 32, 16, 32
    B, C, T = 2, 1, 40
    F = n_fft // 2 + 1
    x = jax.random.normal(key0, (B, C, F, T, 2), dtype=jnp.float32)
    ref = _numpy_reference(np.asarray(x), n_fft, hop_length, win_length, 600)

    # Exactness of the shared-basis + in-kernel OLA restructure (f32 operands).
    mod_f32 = ISTFTPallas(n_fft, hop_length, win_length, length=600,
                          compute_dtype=jnp.float32)
    y32 = jax.block_until_ready(mod_f32(x))
    assert y32.shape == (B, C, 600), y32.shape
    np.testing.assert_allclose(np.asarray(y32), ref, rtol=1e-3, atol=1e-4)

    # Production config: bf16 basis/LHS, f32 MXU accumulation, f32 envelope.
    mod_bf16 = ISTFTPallas(n_fft, hop_length, win_length, length=600)
    y16 = jax.block_until_ready(mod_bf16(x))
    assert y16.shape == (B, C, 600), y16.shape
    np.testing.assert_allclose(np.asarray(y16), ref, rtol=2e-2, atol=2e-2)

    # Config 2: exercise a deeper overlap (R = 4).
    n_fft2, hop2, T2 = 64, 16, 48
    F2 = n_fft2 // 2 + 1
    x2 = jax.random.normal(key1, (B, C, F2, T2, 2), dtype=jnp.float32)
    ref2 = _numpy_reference(np.asarray(x2), n_fft2, hop2, n_fft2, 600)
    mod2 = ISTFTPallas(n_fft2, hop2, n_fft2, length=600, compute_dtype=jnp.float32)
    y2 = jax.block_until_ready(mod2(x2))
    assert y2.shape == (B, C, 600), y2.shape
    np.testing.assert_allclose(np.asarray(y2), ref2, rtol=1e-3, atol=1e-4)

    print("KERNEL_OK")
</pallas_src>

<mosaic_0001>
module attributes {stable_mosaic.version = 11 : i64} {
  func.func @_istft_ola_kernel(%arg0: i32, %arg1: memref<1x40x34xf32, #tpu.memory_space<vmem>>, %arg2: memref<34x32xf32, #tpu.memory_space<vmem>>, %arg3: memref<48x16xf32, #tpu.memory_space<vmem>>, %arg4: memref<1x48x16xf32, #tpu.memory_space<vmem>>) attributes {dimension_semantics = [#tpu.dimension_semantics<parallel>], iteration_bounds = array<i64: 2>, scalar_prefetch = 0 : i64, scratch_operands = 0 : i64, tpu.core_type = #tpu.core_type<tc>, window_params = [{transform_indices = @transform_0, window_bounds = array<i64: 1, 40, 34>}, {pipeline_mode = #tpu.pipeline_mode<synchronous>, transform_indices = @transform_1, window_bounds = array<i64: 34, 32>}, {pipeline_mode = #tpu.pipeline_mode<synchronous>, transform_indices = @transform_2, window_bounds = array<i64: 48, 16>}, {transform_indices = @transform_3, window_bounds = array<i64: 1, 48, 16>}]} {
    %c0 = arith.constant 0 : index
    %c0_0 = arith.constant 0 : index
    %c0_1 = arith.constant 0 : index
    %0 = vector.load %arg1[%c0, %c0_0, %c0_1] : memref<1x40x34xf32, #tpu.memory_space<vmem>>, vector<1x40x34xf32>
    %1 = vector.shape_cast %0 : vector<1x40x34xf32> to vector<40x34xf32>
    %c0_2 = arith.constant 0 : index
    %c0_3 = arith.constant 0 : index
    %2 = vector.load %arg2[%c0_2, %c0_3] : memref<34x32xf32, #tpu.memory_space<vmem>>, vector<34x32xf32>
    %cst = arith.constant dense<0.000000e+00> : vector<40x32xf32>
    %3 = tpu.matmul %1, %2, %cst {dimension_numbers = #tpu.dot_dimension_numbers<[1], [0], [0], [1], [0, 0, 1, 1], [], []>} : vector<40x34xf32>, vector<34x32xf32>, vector<40x32xf32> -> vector<40x32xf32>
    %cst_4 = arith.constant 0.000000e+00 : f32
    %4 = vector.broadcast %cst_4 : f32 to vector<48x16xf32>
    %c0_5 = arith.constant 0 : index
    %c0_6 = arith.constant 0 : index
    %c0_7 = arith.constant 0 : index
    %5 = vector.load %arg4[%c0_5, %c0_6, %c0_7] : memref<1x48x16xf32, #tpu.memory_space<vmem>>, vector<1x48x16xf32>
    %6 = vector.shape_cast %5 : vector<1x48x16xf32> to vector<48x16xf32>
    %7 = vector.shape_cast %4 : vector<48x16xf32> to vector<1x48x16xf32>
    tpu.vector_store %arg4[%c0_5, %c0_6, %c0_7], %7 {strides = array<i32>} : memref<1x48x16xf32, #tpu.memory_space<vmem>>, vector<1x48x16xf32>,
    %c0_8 = arith.constant 0 : index
    %c0_9 = arith.constant 0 : index
    %c0_10 = arith.constant 0 : index
    %8 = vector.load %arg4[%c0_8, %c0_9, %c0_10] : memref<1x48x16xf32, #tpu.memory_space<vmem>>, vector<1x40x16xf32>
    %9 = vector.shape_cast %8 : vector<1x40x16xf32> to vector<40x16xf32>
    %10 = vector.extract_strided_slice %3 {offsets = [0, 0], sizes = [40, 16], strides = [1, 1]} : vector<40x32xf32> to vector<40x16xf32>
    %11 = arith.addf %9, %10 : vector<40x16xf32>
    %c0_11 = arith.constant 0 : index
    %c0_12 = arith.constant 0 : index
    %c0_13 = arith.constant 0 : index
    %12 = vector.load %arg4[%c0_11, %c0_12, %c0_13] : memref<1x48x16xf32, #tpu.memory_space<vmem>>, vector<1x40x16xf32>
    %13 = vector.shape_cast %12 : vector<1x40x16xf32> to vector<40x16xf32>
    %14 = vector.shape_cast %11 : vector<40x16xf32> to vector<1x40x16xf32>
    tpu.vector_store %arg4[%c0_11, %c0_12, %c0_13], %14 {strides = array<i32>} : memref<1x48x16xf32, #tpu.memory_space<vmem>>, vector<1x40x16xf32>,
    %c0_14 = arith.constant 0 : index
    %c1 = arith.constant 1 : index
    %c0_15 = arith.constant 0 : index
    %15 = vector.load %arg4[%c0_14, %c1, %c0_15] : memref<1x48x16xf32, #tpu.memory_space<vmem>>, vector<1x40x16xf32>
    %16 = vector.shape_cast %15 : vector<1x40x16xf32> to vector<40x16xf32>
    %17 = vector.extract_strided_slice %3 {offsets = [0, 16], sizes = [40, 16], strides = [1, 1]} : vector<40x32xf32> to vector<40x16xf32>
    %18 = arith.addf %16, %17 : vector<40x16xf32>
    %c0_16 = arith.constant 0 : index
    %c1_17 = arith.constant 1 : index
    %c0_18 = arith.constant 0 : index
    %19 = vector.load %arg4[%c0_16, %c1_17, %c0_18] : memref<1x48x16xf32, #tpu.memory_space<vmem>>, vector<1x40x16xf32>
    %20 = vector.shape_cast %19 : vector<1x40x16xf32> to vector<40x16xf32>
    %21 = vector.shape_cast %18 : vector<40x16xf32> to vector<1x40x16xf32>
    tpu.vector_store %arg4[%c0_16, %c1_17, %c0_18], %21 {strides = array<i32>} : memref<1x48x16xf32, #tpu.memory_space<vmem>>, vector<1x40x16xf32>,
    %c0_19 = arith.constant 0 : index
    %c0_20 = arith.constant 0 : index
    %c0_21 = arith.constant 0 : index
    %22 = vector.load %arg4[%c0_19, %c0_20, %c0_21] : memref<1x48x16xf32, #tpu.memory_space<vmem>>, vector<1x48x16xf32>
    %23 = vector.shape_cast %22 : vector<1x48x16xf32> to vector<48x16xf32>
    %c0_22 = arith.constant 0 : index
    %c0_23 = arith.constant 0 : index
    %24 = vector.load %arg3[%c0_22, %c0_23] : memref<48x16xf32, #tpu.memory_space<vmem>>, vector<48x16xf32>
    %25 = arith.mulf %23, %24 : vector<48x16xf32>
    %c0_24 = arith.constant 0 : index
    %c0_25 = arith.constant 0 : index
    %c0_26 = arith.constant 0 : index
    %26 = vector.load %arg4[%c0_24, %c0_25, %c0_26] : memref<1x48x16xf32, #tpu.memory_space<vmem>>, vector<1x48x16xf32>
    %27 = vector.shape_cast %26 : vector<1x48x16xf32> to vector<48x16xf32>
    %28 = vector.shape_cast %25 : vector<48x16xf32> to vector<1x48x16xf32>
    tpu.vector_store %arg4[%c0_24, %c0_25, %c0_26], %28 {strides = array<i32>} : memref<1x48x16xf32, #tpu.memory_space<vmem>>, vector<1x48x16xf32>,
    return
  }
  func.func @transform_0(%arg0: i32) -> (i32, i32, i32) {
    %c0_i32 = arith.constant 0 : i32
    %c0_i32_0 = arith.constant 0 : i32
    %c0_i32_1 = arith.constant 0 : i32
    return %arg0, %c0_i32, %c0_i32_0 : i32, i32, i32
  }
  func.func @transform_1(%arg0: i32) -> (i32, i32) {
    %c0_i32 = arith.constant 0 : i32
    %c0_i32_0 = arith.constant 0 : i32
    %c0_i32_1 = arith.constant 0 : i32
    return %c0_i32, %c0_i32_0 : i32, i32
  }
  func.func @transform_2(%arg0: i32) -> (i32, i32) {
    %c0_i32 = arith.constant 0 : i32
    %c0_i32_0 = arith.constant 0 : i32
    %c0_i32_1 = arith.constant 0 : i32
    return %c0_i32, %c0_i32_0 : i32, i32
  }
  func.func @transform_3(%arg0: i32) -> (i32, i32, i32) {
    %c0_i32 = arith.constant 0 : i32
    %c0_i32_0 = arith.constant 0 : i32
    %c0_i32_1 = arith.constant 0 : i32
    return %arg0, %c0_i32, %c0_i32_0 : i32, i32, i32
  }
}

</mosaic_0001>

<llo_original>
// kernel: _istft_forward.1
$region0: #{_istft_forward.1}
  #allocation0 [shape = 'u32[]', space=smem, size = 0x4, offset = 0x4, fixed_abs, tag = 'smem constant byte address 0x4 - core index']
  #allocation1 [shape = 'u32[144,128]{1,0:T(1,128)}', space=vmem, size = 0x12000, scoped, tag = 'internal scratch']
  %s0 = inlined_call_operand.vmem [shape: f32[2,40,34], index: 0, kind: input, shape index: {}]
  %s1 = inlined_call_operand.vmem [shape: f32[34,32], index: 1, kind: input, shape index: {}]
  %s2 = inlined_call_operand.vmem [shape: f32[48,16], index: 2, kind: input, shape index: {}]
  %s3 = inlined_call_operand.vmem [shape: f32[2,48,16], index: 3, kind: output, shape index: {}]
  %s4 = sld [smem:[#allocation0]]
  $region45: #{_istft_forward.1} parent=0
    _
  %s6 = ssub.s32 1, %s4
  %s7 = scalar_select 0, %s6, %s4
  loop: start=0, step=1, limit=4
  $region2: #{_istft_forward.1} parent=0 // loop_pre_header
    _
  $region3: #{_istft_forward.1} parent=0 // loop_header
    %s9 = sphi 0, %s13
    %p10 = scmp.ge.s32.totalorder %s9, 4
    %s19 = sphi 0, %s21
    %s22 = sphi 0, %s19
    %s23 = sphi 0, %s22
    %s39 = sphi 0, %s23
    %s43 = sphi 0, %s43
    %s45 = sphi 0, %s43
    %s46 = sphi 0, %s45
    %s60 = sphi 0, %s46
    %s64 = sphi 0, %s64
    %s66 = sphi 0, %s64
    %s67 = sphi 0, %s66
    %s81 = sphi 0, %s67
    %s87 = sphi 0, %s89
    %s90 = sphi 0, %s87
    %s91 = sphi 0, %s90
    %s107 = sphi 0, %s91
  $region4: #{_istft_forward.1} parent=0 // loop_header_branch
    %12 = sbr.rel (%p10) target = $region8
  $region5: #{_istft_forward.1} parent=0 // loop_body
    %s14 = ssub.s32 %s9, 1
    %s15 = ssub.s32 %s9, 2
    %s16 = sadd.s32 %s9, 1
    %s17 = ssub.s32 %s9, %s16
    %p18 = scmp.eq.s32.totalorder %s17, 0
    %s20 = sadd.s32 %s19, 1
    %s21 = scalar_select %p18, %s19, %s20
    %p24 = pneg %p18
    %p25 = scmp.eq.s32.totalorder %s9, 1
    %p26 = por %p24, %p25
    %p27 = scmp.ne.s32.totalorder %s19, %s22
    %p28 = scmp.eq.s32.totalorder %s9, 0
    %p29 = por %p27, %p28
    %p30 = scmp.ne.s32.totalorder %s19, %s22
    %p31 = scmp.eq.s32.totalorder %s14, 1
    %p32 = por %p30, %p31
    %p33 = scmp.ne.s32.totalorder %s22, %s23
    %p34 = scmp.eq.s32.totalorder %s14, 0
    %p35 = por %p33, %p34
    %p36 = scmp.ne.s32.totalorder %s22, %s23
    %p37 = scmp.eq.s32.totalorder %s15, 1
    %p38 = por %p36, %p37
    %p40 = scmp.ne.s32.totalorder %s23, %s39
    %p41 = scmp.eq.s32.totalorder %s15, 0
    %p42 = por %p40, %p41
    %s44 = sadd.s32 %s43, 1
    %p47 = scmp.eq.s32.totalorder %s9, 1
    %p48 = scmp.ne.s32.totalorder %s43, %s45
    %p49 = scmp.eq.s32.totalorder %s9, 0
    %p50 = por %p48, %p49
    %p51 = scmp.ne.s32.totalorder %s43, %s45
    %p52 = scmp.eq.s32.totalorder %s14, 1
    %p53 = por %p51, %p52
    %p54 = scmp.ne.s32.totalorder %s45, %s46
    %p55 = scmp.eq.s32.totalorder %s14, 0
    %p56 = por %p54, %p55
    %p57 = scmp.ne.s32.totalorder %s45, %s46
    %p58 = scmp.eq.s32.totalorder %s15, 1
    %p59 = por %p57, %p58
    %p61 = scmp.ne.s32.totalorder %s46, %s60
    %p62 = scmp.eq.s32.totalorder %s15, 0
    %p63 = por %p61, %p62
    %s65 = sadd.s32 %s64, 1
    %p68 = scmp.eq.s32.totalorder %s9, 1
    %p69 = scmp.ne.s32.totalorder %s64, %s66
    %p70 = scmp.eq.s32.totalorder %s9, 0
    %p71 = por %p69, %p70
    %p72 = scmp.ne.s32.totalorder %s64, %s66
    %p73 = scmp.eq.s32.totalorder %s14, 1
    %p74 = por %p72, %p73
    %p75 = scmp.ne.s32.totalorder %s66, %s67
    %p76 = scmp.eq.s32.totalorder %s14, 0
    %p77 = por %p75, %p76
    %p78 = scmp.ne.s32.totalorder %s66, %s67
    %p79 = scmp.eq.s32.totalorder %s15, 1
    %p80 = por %p78, %p79
    %p82 = scmp.ne.s32.totalorder %s67, %s81
    %p83 = scmp.eq.s32.totalorder %s15, 0
    %p84 = por %p82, %p83
    %s85 = ssub.s32 %s9, %s16
    %p86 = scmp.eq.s32.totalorder %s85, 0
    %s88 = sadd.s32 %s87, 1
    %s89 = scalar_select %p86, %s87, %s88
    %p92 = pneg %p86
    %p93 = scmp.eq.s32.totalorder %s9, 1
    %p94 = por %p92, %p93
    %p95 = scmp.ne.s32.totalorder %s87, %s90
    %p96 = scmp.eq.s32.totalorder %s9, 0
    %p97 = por %p95, %p96
    %p98 = scmp.ne.s32.totalorder %s87, %s90
    %p99 = scmp.eq.s32.totalorder %s14, 1
    %p100 = por %p98, %p99
    %p101 = scmp.ne.s32.totalorder %s90, %s91
    %p102 = scmp.eq.s32.totalorder %s14, 0
    %p103 = por %p101, %p102
    %p104 = scmp.ne.s32.totalorder %s90, %s91
    %p105 = scmp.eq.s32.totalorder %s15, 1
    %p106 = por %p104, %p105
    %p108 = scmp.ne.s32.totalorder %s91, %s107
    %p109 = scmp.eq.s32.totalorder %s15, 0
    %p110 = por %p108, %p109
    %p111 = scmp.le.s32.totalorder 1, %s9
    %p112 = scmp.lt.s32.totalorder %s9, 3
    %p113 = pnand %p111, %p112
    %p114 = pneg %p113
    // Predicated region
    $region9: #{_istft_forward.1} parent=5 // pred_check
      _
    $region10: #{_istft_forward.1} parent=5 // pred_check_branch
      %116 = sbr.rel (%p113) target = $region12
    $region11: #{_istft_forward.1} parent=5 // pred_region
      %s117 = ssub.s32 %s9, 1
      // Predicated region
      $region13: #{_istft_forward.1} parent=11 // pred_check
        %p118 = pneg %p56
      $region14: #{_istft_forward.1} parent=11 // pred_check_branch
        %120 = sbr.rel (%p118) target = $region16
      $region15: #{_istft_forward.1} parent=11 // pred_region
        _
      $region16: #{_istft_forward.1} parent=11 // pred_fallthru
        _
      // Predicated region
      $region17: #{_istft_forward.1} parent=11 // pred_check
        %p121 = pneg %p77
      $region18: #{_istft_forward.1} parent=11 // pred_check_branch
        %123 = sbr.rel (%p121) target = $region20
      $region19: #{_istft_forward.1} parent=11 // pred_region
        _
      $region20: #{_istft_forward.1} parent=11 // pred_fallthru
        _
    $region12: #{_istft_forward.1} parent=5 // pred_fallthru
      _
    %p124 = scmp.lt.s32.totalorder %s9, 2
    // Predicated region
    $region21: #{_istft_forward.1} parent=5 // pred_check
      %p125 = pneg %p124
    $region22: #{_istft_forward.1} parent=5 // pred_check_branch
      %127 = sbr.rel (%p125) target = $region24
    $region23: #{_istft_forward.1} parent=5 // pred_region
      // Predicated region
      $region25: #{_istft_forward.1} parent=23 // pred_check
        %p128 = pneg %p29
      $region26: #{_istft_forward.1} parent=23 // pred_check_branch
        %130 = sbr.rel (%p128) target = $region28
      $region27: #{_istft_forward.1} parent=23 // pred_region
        %p131 = scmp.lt.s32.totalorder %s9, 1
        %s132 = scalar_select %p131, %s9, 1
        %s133 = smul.addr %s132, 5
        %s134 = smul.addr %s133, 8
        %s135 = scalar_lea.vmem %s0, %s134
      $region28: #{_istft_forward.1} parent=23 // pred_fallthru
        _
    $region24: #{_istft_forward.1} parent=5 // pred_fallthru
      _
    %p136 = scmp.le.s32.totalorder 1, %s9
    %p137 = scmp.lt.s32.totalorder %s9, 3
    %p138 = pnand %p136, %p137
    %p139 = pneg %p138
    // Predicated region
    $region29: #{_istft_forward.1} parent=5 // pred_check
      _
    $region30: #{_istft_forward.1} parent=5 // pred_check_branch
      %141 = sbr.rel (%p138) target = $region32
    $region31: #{_istft_forward.1} parent=5 // pred_region
      %s142 = ssub.s32 %s9, 1
      %p143 = scmp.lt.s32.totalorder %s14, 1
      %s144 = scalar_select %p143, %s14, 1
      %s145 = smul.addr %s144, 5
      %s146 = smul.addr %s145, 8
      %s147 = scalar_lea.vmem %s0, %s146
      %p148 = pneg %p35
      %p149 = pneg %p32
      %p150 = pneg %p56
      %p151 = pneg %p53
      %p152 = pneg %p77
      %p153 = pneg %p74
      %p154 = pneg %p103
      %p155 = pneg %p100
      %p156 = scmp.lt.s32.totalorder %s14, 1
      %s157 = scalar_select %p156, %s14, 1
      %s158 = smul.addr %s157, 6
      %s159 = smul.addr %s158, 8
      %s160 = scalar_lea.vmem %s3, %s159
      %p161 = scmp.lt.s32.totalorder %s14, 1
      %s162 = scalar_select %p161, %s14, 1
      %s163 = smul.addr %s162, 5
      %s164 = smul.addr %s163, 8
      %s165 = scalar_lea.vmem %s0, %s164
      %p166 = scmp.lt.s32.totalorder %s14, 1
      %s167 = scalar_select %p166, %s14, 1
      %s168 = smul.addr %s167, 6
      %s169 = smul.addr %s168, 8
      %s170 = scalar_lea.vmem %s3, %s169
      %v171 = vld [vmem:[%s165] sm:$0xff]
      %v172 = vld [vmem:[%s165 + $0x8] sm:$0xff]
      %v173 = vld [vmem:[%s165 + $0x10] sm:$0xff]
      %v174 = vld [vmem:[%s165 + $0x18] sm:$0xff]
      %v175 = vld [vmem:[%s165 + $0x20] sm:$0xff]
      %v176 = vld [vmem:[%s1] sm:$0xff]
      %v177 = vld [vmem:[%s1 + $0x8] sm:$0xff]
      %v178 = vld [vmem:[%s1 + $0x10] sm:$0xff]
      %v179 = vld [vmem:[%s1 + $0x18] sm:$0xff]
      %v180 = vld [vmem:[%s1 + $0x20] sm:$0x3]
      %vm181 = vcmask 277504
      %v183 = vsel %vm181, %v171, 0
      %v186 = vsel %vm181, %v172, 0
      %v189 = vsel %vm181, %v173, 0
      %v192 = vsel %vm181, %v174, 0
      %v195 = vsel %vm181, %v175, 0
      %vm197 = vcmask 1041408
      %v199 = vsel %vm197, %v180, 0
      %201 = vmatprep.subr.mxu0 0.0
      %202 = vmatpush1.msra.mxu0 %v176
      %203 = vmatprep.subr.mxu0 0.0
      %204 = vmatpush1.msra.mxu0 %v177
      %205 = vmatprep.subr.mxu0 0.0
      %206 = vmatpush1.msra.mxu0 %v178
      %207 = vmatprep.subr.mxu0 0.0
      %208 = vmatpush1.msra.mxu0 %v179
      %209 = vmatprep.subr.mxu0 0.0
      %210 = vmatpush1.msra.mxu0 %v199
      %211 = vmatprep.subr.mxu0 0.0
      %212 = vmatpush1.msra.mxu0 0.0
      %213 = vmatprep.subr.mxu0 0.0
      %214 = vmatpush1.msra.mxu0 0.0
      %215 = vmatprep.subr.mxu0 0.0
      %216 = vmatpush1.msra.mxu0 0.0
      %217 = vmatprep.subr.mxu0 0.0
      %218 = vmatpush1.msra.mxu0 0.0
      %219 = vmatprep.subr.mxu0 0.0
      %220 = vmatpush1.msra.mxu0 0.0
      %221 = vmatprep.subr.mxu0 0.0
      %222 = vmatpush1.msra.mxu0 0.0
      %223 = vmatprep.subr.mxu0 0.0
      %224 = vmatpush1.msra.mxu0 0.0
      %225 = vmatprep.subr.mxu0 0.0
      %226 = vmatpush1.msra.mxu0 0.0
      %227 = vmatprep.subr.mxu0 0.0
      %228 = vmatpush1.msra.mxu0 0.0
      %229 = vmatprep.subr.mxu0 0.0
      %230 = vmatpush1.msra.mxu0 0.0
      %231 = vmatprep.subr.mxu0 0.0
      %232 = vmatpush1.msra.mxu0 0.0
      %233 = vmatprep.subr.mxu0 0.0
      %234 = vmatpush1.msra.mxu0 0.0
      %235 = vmatprep.subr.mxu0 0.0
      %236 = vmatpush1.msra.mxu0 0.0
      %237 = vmatprep.subr.mxu0 0.0
      %238 = vmatpush1.msra.mxu0 0.0
      %239 = vmatprep.subr.mxu0 0.0
      %240 = vmatpush1.msra.mxu0 0.0
      %241 = vmatprep.subr.mxu0 0.0
      %242 = vmatpush1.msra.mxu0 0.0
      %243 = vmatprep.subr.mxu0 0.0
      %244 = vmatpush1.msra.mxu0 0.0
      %245 = vmatprep.subr.mxu0 0.0
      %246 = vmatpush1.msra.mxu0 0.0
      %247 = vmatprep.subr.mxu0 0.0
      %248 = vmatpush1.msra.mxu0 0.0
      %249 = vmatprep.subr.mxu0 0.0
      %250 = vmatpush1.msra.mxu0 0.0
      %251 = vmatprep.subr.mxu0 0.0
      %252 = vmatpush1.msra.mxu0 0.0
      %253 = vmatprep.subr.mxu0 0.0
      %254 = vmatpush1.msra.mxu0 0.0
      %255 = vmatprep.subr.mxu0 0.0
      %256 = vmatpush1.msra.mxu0 0.0
      %257 = vmatprep.subr.mxu0 0.0
      %258 = vmatpush1.msra.mxu0 0.0
      %259 = vmatprep.subr.mxu0 0.0
      %260 = vmatpush1.msra.mxu0 0.0
      %261 = vmatprep.subr.mxu0 0.0
      %262 = vmatpush1.msra.mxu0 0.0
      %263 = vmatprep.subr.mxu0 0.0
      %264 = vmatpush1.msra.mxu0 0.0
      %265 = vmatprep.mubr.f32.mxu0 0.0
      %266 = vmatmul.mubr.f32.gmra.mrb[0].mxu0 %v183
      %v267 = vpop.f32.mrb[0].mxu0
      %v268 = vadd.f32 0.0, %v267
      %v269 = vpop.f32.mrb[0].mxu0
      %270 = vmatprep.mubr.f32.mxu0 0.0
      %271 = vmatmul.mubr.f32.gmra.mrb[0].mxu0 %v186
      %v272 = vpop.f32.mrb[0].mxu0
      %v273 = vadd.f32 0.0, %v272
      %v274 = vpop.f32.mrb[0].mxu0
      %275 = vmatprep.mubr.f32.mxu0 0.0
      %276 = vmatmul.mubr.f32.gmra.mrb[0].mxu0 %v189
      %v277 = vpop.f32.mrb[0].mxu0
      %v278 = vadd.f32 0.0, %v277
      %v279 = vpop.f32.mrb[0].mxu0
      %280 = vmatprep.mubr.f32.mxu0 0.0
      %281 = vmatmul.mubr.f32.gmra.mrb[0].mxu0 %v192
      %v282 = vpop.f32.mrb[0].mxu0
      %v283 = vadd.f32 0.0, %v282
      %v284 = vpop.f32.mrb[0].mxu0
      %285 = vmatprep.mubr.f32.mxu0 0.0
      %286 = vmatmul.mubr.f32.gmra.mrb[0].mxu0 %v195
      %v287 = vpop.f32.mrb[0].mxu0
      %v288 = vadd.f32 0.0, %v287
      %v289 = vpop.f32.mrb[0].mxu0
      %290 = vdwg.mxu0
      %vm291 = vcmask 130048
      %292 = vst.msk [vmem:[%s170] sm:$0xff] %vm291, 0.0
      %293 = vst.msk [vmem:[%s170 + $0x8] sm:$0xff] %vm291, 0.0
      %294 = vst.msk [vmem:[%s170 + $0x10] sm:$0xff] %vm291, 0.0
      %295 = vst.msk [vmem:[%s170 + $0x18] sm:$0xff] %vm291, 0.0
      %296 = vst.msk [vmem:[%s170 + $0x20] sm:$0xff] %vm291, 0.0
      %297 = vst.msk [vmem:[%s170 + $0x28] sm:$0xff] %vm291, 0.0
      %v298 = vld [vmem:[%s170] sm:$0xff]
      %v299 = vld [vmem:[%s170 + $0x8] sm:$0xff]
      %v300 = vld [vmem:[%s170 + $0x10] sm:$0xff]
      %v301 = vld [vmem:[%s170 + $0x18] sm:$0xff]
      %v302 = vld [vmem:[%s170 + $0x20] sm:$0xff]
      %v303 = vadd.f32 %v298, %v268
      %v304 = vadd.f32 %v299, %v273
      %v305 = vadd.f32 %v300, %v278
      %v306 = vadd.f32 %v301, %v283
      %v307 = vadd.f32 %v302, %v288
      %308 = vst.msk [vmem:[%s170] sm:$0xff] %vm291, %v303
      %309 = vst.msk [vmem:[%s170 + $0x8] sm:$0xff] %vm291, %v304
      %310 = vst.msk [vmem:[%s170 + $0x10] sm:$0xff] %vm291, %v305
      %311 = vst.msk [vmem:[%s170 + $0x18] sm:$0xff] %vm291, %v306
      %312 = vst.msk [vmem:[%s170 + $0x20] sm:$0xff] %vm291, %v307
      %v313 = vld [vmem:[%s170 + $0x1] sm:$0xff]
      %v314 = vld [vmem:[%s170 + $0x9] sm:$0xff]
      %v315 = vld [vmem:[%s170 + $0x11] sm:$0xff]
      %v316 = vld [vmem:[%s170 + $0x19] sm:$0xff]
      %v317 = vld [vmem:[%s170 + $0x21] sm:$0xff]
      %323 = vrot.lane.b32.xlu0 %v268, 112
      %v324 = vpop.permute.xlu0 %323
      %325 = vrot.lane.b32.xlu0 %v273, 112
      %v326 = vpop.permute.xlu0 %325
      %327 = vrot.lane.b32.xlu0 %v278, 112
      %v328 = vpop.permute.xlu0 %327
      %329 = vrot.lane.b32.xlu0 %v283, 112
      %v330 = vpop.permute.xlu0 %329
      %331 = vrot.lane.b32.xlu0 %v288, 112
      %v332 = vpop.permute.xlu0 %331
      %v338 = vadd.f32 %v313, %v324
      %v339 = vadd.f32 %v314, %v326
      %v340 = vadd.f32 %v315, %v328
      %v341 = vadd.f32 %v316, %v330
      %v342 = vadd.f32 %v317, %v332
      %343 = vst.msk [vmem:[%s170 + $0x1] sm:$0xff] %vm291, %v338
      %344 = vst.msk [vmem:[%s170 + $0x9] sm:$0xff] %vm291, %v339
      %345 = vst.msk [vmem:[%s170 + $0x11] sm:$0xff] %vm291, %v340
      %346 = vst.msk [vmem:[%s170 + $0x19] sm:$0xff] %vm291, %v341
      %347 = vst.msk [vmem:[%s170 + $0x21] sm:$0xff] %vm291, %v342
      %v348 = vld [vmem:[%s170] sm:$0xff]
      %v349 = vld [vmem:[%s170 + $0x8] sm:$0xff]
      %v350 = vld [vmem:[%s170 + $0x10] sm:$0xff]
      %v351 = vld [vmem:[%s170 + $0x18] sm:$0xff]
      %v352 = vld [vmem:[%s170 + $0x20] sm:$0xff]
      %v353 = vld [vmem:[%s170 + $0x28] sm:$0xff]
      %v354 = vld [vmem:[%s2] sm:$0xff]
      %v355 = vld [vmem:[%s2 + $0x8] sm:$0xff]
      %v356 = vld [vmem:[%s2 + $0x10] sm:$0xff]
      %v357 = vld [vmem:[%s2 + $0x18] sm:$0xff]
      %v358 = vld [vmem:[%s2 + $0x20] sm:$0xff]
      %v359 = vld [vmem:[%s2 + $0x28] sm:$0xff]
      %v360 = vmul.f32 %v348, %v354
      %v361 = vmul.f32 %v349, %v355
      %v362 = vmul.f32 %v350, %v356
      %v363 = vmul.f32 %v351, %v357
      %v364 = vmul.f32 %v352, %v358
      %v365 = vmul.f32 %v353, %v359
      %366 = vst.msk [vmem:[%s170] sm:$0xff] %vm291, %v360
      %367 = vst.msk [vmem:[%s170 + $0x8] sm:$0xff] %vm291, %v361
      %368 = vst.msk [vmem:[%s170 + $0x10] sm:$0xff] %vm291, %v362
      %369 = vst.msk [vmem:[%s170 + $0x18] sm:$0xff] %vm291, %v363
      %370 = vst.msk [vmem:[%s170 + $0x20] sm:$0xff] %vm291, %v364
      %371 = vst.msk [vmem:[%s170 + $0x28] sm:$0xff] %vm291, %v365
      %p372 = scmp.lt.s32.totalorder %s14, 1
      %s373 = scalar_select %p372, %s14, 1
      %s374 = smul.addr %s373, 6
      %s375 = smul.addr %s374, 8
      %s376 = scalar_lea.vmem %s3, %s375
      // Predicated region
      $region33: #{_istft_forward.1} parent=31 // pred_check
        %p377 = pneg %p100
      $region34: #{_istft_forward.1} parent=31 // pred_check_branch
        %379 = sbr.rel (%p377) target = $region36
      $region35: #{_istft_forward.1} parent=31 // pred_region
        _
      $region36: #{_istft_forward.1} parent=31 // pred_fallthru
        _
    $region32: #{_istft_forward.1} parent=5 // pred_fallthru
      _
    %p380 = scmp.le.s32.totalorder 2, %s9
    // Predicated region
    $region37: #{_istft_forward.1} parent=5 // pred_check
      %p381 = pneg %p380
    $region38: #{_istft_forward.1} parent=5 // pred_check_branch
      %383 = sbr.rel (%p381) target = $region40
    $region39: #{_istft_forward.1} parent=5 // pred_region
      %s384 = ssub.s32 %s9, 2
      // Predicated region
      $region41: #{_istft_forward.1} parent=39 // pred_check
        %p385 = pneg %p106
      $region42: #{_istft_forward.1} parent=39 // pred_check_branch
        %387 = sbr.rel (%p385) target = $region44
      $region43: #{_istft_forward.1} parent=39 // pred_region
        %p388 = scmp.lt.s32.totalorder %s15, 1
        %s389 = scalar_select %p388, %s15, 1
        %s390 = smul.addr %s389, 6
        %s391 = smul.addr %s390, 8
        %s392 = scalar_lea.vmem %s3, %s391
      $region44: #{_istft_forward.1} parent=39 // pred_fallthru
        _
    $region40: #{_istft_forward.1} parent=5 // pred_fallthru
      _
  $region6: #{_istft_forward.1} parent=0 // loop_footer
    %s13 = sadd.s32 1, %s9
  $region7: #{_istft_forward.1} parent=0 // loop_footer_branch
    %8 = sbr.rel target = $region3
  $region8: #{_istft_forward.1} parent=0 // loop_exit
    _

</llo_original>
